<compile_context>
chip_gen: v5e
topology: v5e:2x2
jax: 0.10.0
libtpu: 0.0.40
codegen_flags: <defaults>
</compile_context>

<pallas_src>
import functools

import jax
import jax.numpy as jnp
from jax.experimental import pallas as pl
from jax.experimental.pallas import tpu as pltpu


def _round_up(v, m):
    return ((v + m - 1) // m) * m


def _num_tensorcores_per_chip():
    """Best-effort TensorCore count per chip (v7x=2, v5e/v6e=1).

    Falls back to 1 if the info is unavailable, which only disables the
    optional small-batch split (never affects correctness).
    """
    try:
        info = pltpu.get_tpu_info()
        for attr in ("num_cores", "num_tensorcores", "tensorcores_per_chip",
                     "cores_per_chip"):
            n = getattr(info, attr, None)
            if isinstance(n, int) and n > 0:
                return n
    except Exception:
        pass
    return 1


def _pick_batch_tile(batch, requested, num_cores):
    """Overhead/MXU-friendly batch tile.

    - multiple of 8 (sublane), never below 8
    - single block covering the whole batch when it fits (no forced grid
      overhead on single-TensorCore chips)
    - large batches use the requested tile (default 2048) so the ~0.35 us
      per-grid-step fixed cost is amortized
    - on multi-TC chips (v7x), a big single-block batch is split into
      >= num_cores MXU-M-aligned (256-row) tiles so megacore sharding gets
      balanced work
    """
    requested = max(8, (requested // 8) * 8)
    if batch > requested:
        return requested
    if num_cores > 1 and batch >= 2 * 256:
        tile = _round_up(pl.cdiv(batch, num_cores), 256)
        if tile < batch:
            return tile
    return batch


def _fc_encoder_kernel(x_ref, w1_ref, b1_ref, w2_ref, b2_ref, w3_ref, b3_ref,
                       o_ref):
    """Fused 3-layer MLP: relu(relu(relu(x@W1+b1)@W2+b2)@W3+b3).

    x is loaded in f32 and cast to bf16 in-kernel (free under the MXU/DMA
    roofline).  MXU inputs are bf16, accumulation is f32, bias+ReLU epilogue
    is f32 on the VPU and fused with the bf16 downcast feeding the next dot.
    """
    x = x_ref[...].astype(jnp.bfloat16)

    h = jnp.dot(x, w1_ref[...], preferred_element_type=jnp.float32)
    h = jnp.maximum(h + b1_ref[...], 0.0).astype(jnp.bfloat16)

    h = jnp.dot(h, w2_ref[...], preferred_element_type=jnp.float32)
    h = jnp.maximum(h + b2_ref[...], 0.0).astype(jnp.bfloat16)

    h = jnp.dot(h, w3_ref[...], preferred_element_type=jnp.float32)
    h = jnp.maximum(h + b3_ref[...], 0.0)

    o_ref[...] = h.astype(o_ref.dtype)


@functools.partial(jax.jit, static_argnames=("batch_tile", "out_dtype"))
def fc_encoder(x, params, batch_tile=2048, out_dtype=None):
    """x: (B, in_features) f32.

    params: [(W:(in,out) bf16, b:(1,out) f32), ...] as produced by
    prepare_fc_encoder_params (weights pre-cast once, not per call).
    out_dtype: None -> same dtype as x (matches the PyTorch module);
    jnp.bfloat16 halves the output HBM stream when the consumer allows it.
    """
    (w1, b1), (w2, b2), (w3, b3) = params
    B, in_dim = x.shape
    h1, h2, out_dim = w1.shape[1], w2.shape[1], w3.shape[1]
    if out_dtype is None:
        out_dtype = x.dtype

    bt = _pick_batch_tile(B, batch_tile, _num_tensorcores_per_chip())
    grid = (pl.cdiv(B, bt),)

    full = lambda arr: pl.BlockSpec(arr.shape, lambda i: (0, 0))

    flops = 2 * B * (in_dim * h1 + h1 * h2 + h2 * out_dim)
    bytes_accessed = (
        x.size * x.dtype.itemsize                          # f32 activations in
        + (w1.size + w2.size + w3.size) * 2                # bf16 weights
        + (b1.size + b2.size + b3.size) * 4                # f32 biases
        + B * out_dim * jnp.dtype(out_dtype).itemsize      # output
    )

    return pl.pallas_call(
        _fc_encoder_kernel,
        out_shape=jax.ShapeDtypeStruct((B, out_dim), out_dtype),
        grid_spec=pltpu.PrefetchScalarGridSpec(
            num_scalar_prefetch=0,
            grid=grid,
            in_specs=[
                pl.BlockSpec((bt, in_dim), lambda i: (i, 0)),
                full(w1), full(b1),
                full(w2), full(b2),
                full(w3), full(b3),
            ],
            out_specs=pl.BlockSpec((bt, out_dim), lambda i: (i, 0)),
        ),
        compiler_params=pltpu.CompilerParams(
            dimension_semantics=("parallel",)),
        cost_estimate=pl.CostEstimate(
            flops=flops, transcendentals=0, bytes_accessed=bytes_accessed),
    )(x, w1, b1, w2, b2, w3, b3)


def init_fc_encoder_params(key, in_features, hidden_dims):
    """Deterministic init mimicking torch.nn.Linear (uniform +/- 1/sqrt(fan_in)).

    Weights are stored as (in_dim, out_dim) == PyTorch weight.T, f32.
    """
    params = []
    in_dim = in_features
    for dim in hidden_dims:
        key, kw, kb = jax.random.split(key, 3)
        bound = 1.0 / jnp.sqrt(in_dim)
        w = jax.random.uniform(kw, (in_dim, dim), jnp.float32, -bound, bound)
        b = jax.random.uniform(kb, (1, dim), jnp.float32, -bound, bound)
        params.append((w, b))
        in_dim = dim
    return params


def prepare_fc_encoder_params(params):
    """One-time cast of weights to bf16 (MXU inputs); biases stay f32."""
    return [(w.astype(jnp.bfloat16), b.astype(jnp.float32)) for w, b in params]


def fc_encoder_ref(x, params_f32, *, bf16_inputs=True):
    """Pure-JAX reference.

    bf16_inputs=True replicates the kernel's bf16 matmul inputs.  Note this
    intentionally diverges from a pure-f32 PyTorch FCEncoder by ~1e-2 rel.
    """
    h = x
    for w, b in params_f32:
        lhs = h.astype(jnp.bfloat16) if bf16_inputs else h
        rhs = w.astype(jnp.bfloat16) if bf16_inputs else w
        h = jnp.maximum(
            jnp.dot(lhs, rhs, preferred_element_type=jnp.float32) + b, 0.0)
    return h


if __name__ == "__main__":
    key = jax.random.PRNGKey(0)

    in_features = 64
    hidden_dims = [256, 128, 128]   # default from the PyTorch module
    params_f32 = init_fc_encoder_params(key, in_features, hidden_dims)
    params = prepare_fc_encoder_params(params_f32)   # bf16 weights, cached

    # --- small single-block case ---------------------------------------
    key, kx = jax.random.split(key)
    x = jax.random.normal(kx, (8, in_features), jnp.float32)

    out = jax.block_until_ready(fc_encoder(x, params))
    ref = fc_encoder_ref(x, params_f32)
    assert out.shape == (8, hidden_dims[-1]), out.shape
    assert out.dtype == x.dtype, out.dtype
    assert jnp.allclose(out, ref, atol=2e-3, rtol=2e-3), "mismatch (small)"

    # --- multi-tile case (grid iteration + padded last block) -----------
    key, kx2 = jax.random.split(key)
    x2 = jax.random.normal(kx2, (200, in_features), jnp.float32)

    out2 = jax.block_until_ready(fc_encoder(x2, params, batch_tile=64))
    ref2 = fc_encoder_ref(x2, params_f32)
    assert out2.shape == (200, hidden_dims[-1]), out2.shape
    assert jnp.allclose(out2, ref2, atol=2e-3, rtol=2e-3), "mismatch (tiled)"

    # --- optional bf16-output path ---------------------------------------
    out_bf = jax.block_until_ready(
        fc_encoder(x2, params, batch_tile=64, out_dtype=jnp.bfloat16))
    assert out_bf.dtype == jnp.bfloat16, out_bf.dtype
    assert jnp.allclose(out_bf.astype(jnp.float32), ref2,
                        atol=5e-2, rtol=5e-2), "mismatch (bf16 out)"

    print("KERNEL_OK")
</pallas_src>

<mosaic_0001>
module attributes {stable_mosaic.version = 11 : i64} {
  func.func @_fc_encoder_kernel(%arg0: i32, %arg1: memref<8x64xf32, #tpu.memory_space<vmem>>, %arg2: memref<64x256xbf16, #tpu.memory_space<vmem>>, %arg3: memref<1x256xf32, #tpu.memory_space<vmem>>, %arg4: memref<256x128xbf16, #tpu.memory_space<vmem>>, %arg5: memref<1x128xf32, #tpu.memory_space<vmem>>, %arg6: memref<128x128xbf16, #tpu.memory_space<vmem>>, %arg7: memref<1x128xf32, #tpu.memory_space<vmem>>, %arg8: memref<8x128xf32, #tpu.memory_space<vmem>>) attributes {dimension_semantics = [#tpu.dimension_semantics<parallel>], iteration_bounds = array<i64: 1>, scalar_prefetch = 0 : i64, scratch_operands = 0 : i64, tpu.core_type = #tpu.core_type<tc>, window_params = [{transform_indices = @transform_0, window_bounds = array<i64: 8, 64>}, {pipeline_mode = #tpu.pipeline_mode<synchronous>, transform_indices = @transform_1, window_bounds = array<i64: 64, 256>}, {pipeline_mode = #tpu.pipeline_mode<synchronous>, transform_indices = @transform_2, window_bounds = array<i64: 1, 256>}, {pipeline_mode = #tpu.pipeline_mode<synchronous>, transform_indices = @transform_3, window_bounds = array<i64: 256, 128>}, {pipeline_mode = #tpu.pipeline_mode<synchronous>, transform_indices = @transform_4, window_bounds = array<i64: 1, 128>}, {pipeline_mode = #tpu.pipeline_mode<synchronous>, transform_indices = @transform_5, window_bounds = array<i64: 128, 128>}, {pipeline_mode = #tpu.pipeline_mode<synchronous>, transform_indices = @transform_6, window_bounds = array<i64: 1, 128>}, {transform_indices = @transform_7, window_bounds = array<i64: 8, 128>}]} {
    %c0 = arith.constant 0 : index
    %c0_0 = arith.constant 0 : index
    %0 = vector.load %arg1[%c0, %c0_0] : memref<8x64xf32, #tpu.memory_space<vmem>>, vector<8x64xf32>
    %1 = arith.truncf %0 : vector<8x64xf32> to vector<8x64xbf16>
    %c0_1 = arith.constant 0 : index
    %c0_2 = arith.constant 0 : index
    %2 = vector.load %arg2[%c0_1, %c0_2] : memref<64x256xbf16, #tpu.memory_space<vmem>>, vector<64x256xbf16>
    %cst = arith.constant dense<0.000000e+00> : vector<8x256xf32>
    %3 = tpu.matmul %1, %2, %cst {dimension_numbers = #tpu.dot_dimension_numbers<[1], [0], [0], [1], [0, 0, 1, 1], [], []>} : vector<8x64xbf16>, vector<64x256xbf16>, vector<8x256xf32> -> vector<8x256xf32>
    %c0_3 = arith.constant 0 : index
    %c0_4 = arith.constant 0 : index
    %4 = vector.load %arg3[%c0_3, %c0_4] : memref<1x256xf32, #tpu.memory_space<vmem>>, vector<1x256xf32>
    %5 = vector.broadcast %4 : vector<1x256xf32> to vector<8x256xf32>
    %6 = arith.addf %3, %5 : vector<8x256xf32>
    %cst_5 = arith.constant 0.000000e+00 : f32
    %7 = vector.broadcast %cst_5 : f32 to vector<8x256xf32>
    %8 = arith.maximumf %6, %7 : vector<8x256xf32>
    %9 = arith.truncf %8 : vector<8x256xf32> to vector<8x256xbf16>
    %c0_6 = arith.constant 0 : index
    %c0_7 = arith.constant 0 : index
    %10 = vector.load %arg4[%c0_6, %c0_7] : memref<256x128xbf16, #tpu.memory_space<vmem>>, vector<256x128xbf16>
    %cst_8 = arith.constant dense<0.000000e+00> : vector<8x128xf32>
    %11 = tpu.matmul %9, %10, %cst_8 {dimension_numbers = #tpu.dot_dimension_numbers<[1], [0], [0], [1], [0, 0, 1, 1], [], []>} : vector<8x256xbf16>, vector<256x128xbf16>, vector<8x128xf32> -> vector<8x128xf32>
    %c0_9 = arith.constant 0 : index
    %c0_10 = arith.constant 0 : index
    %12 = vector.load %arg5[%c0_9, %c0_10] : memref<1x128xf32, #tpu.memory_space<vmem>>, vector<1x128xf32>
    %13 = vector.broadcast %12 : vector<1x128xf32> to vector<8x128xf32>
    %14 = arith.addf %11, %13 : vector<8x128xf32>
    %cst_11 = arith.constant 0.000000e+00 : f32
    %15 = vector.broadcast %cst_11 : f32 to vector<8x128xf32>
    %16 = arith.maximumf %14, %15 : vector<8x128xf32>
    %17 = arith.truncf %16 : vector<8x128xf32> to vector<8x128xbf16>
    %c0_12 = arith.constant 0 : index
    %c0_13 = arith.constant 0 : index
    %18 = vector.load %arg6[%c0_12, %c0_13] : memref<128x128xbf16, #tpu.memory_space<vmem>>, vector<128x128xbf16>
    %cst_14 = arith.constant dense<0.000000e+00> : vector<8x128xf32>
    %19 = tpu.matmul %17, %18, %cst_14 {dimension_numbers = #tpu.dot_dimension_numbers<[1], [0], [0], [1], [0, 0, 1, 1], [], []>} : vector<8x128xbf16>, vector<128x128xbf16>, vector<8x128xf32> -> vector<8x128xf32>
    %c0_15 = arith.constant 0 : index
    %c0_16 = arith.constant 0 : index
    %20 = vector.load %arg7[%c0_15, %c0_16] : memref<1x128xf32, #tpu.memory_space<vmem>>, vector<1x128xf32>
    %21 = vector.broadcast %20 : vector<1x128xf32> to vector<8x128xf32>
    %22 = arith.addf %19, %21 : vector<8x128xf32>
    %cst_17 = arith.constant 0.000000e+00 : f32
    %23 = vector.broadcast %cst_17 : f32 to vector<8x128xf32>
    %24 = arith.maximumf %22, %23 : vector<8x128xf32>
    %c0_18 = arith.constant 0 : index
    %c0_19 = arith.constant 0 : index
    %25 = vector.load %arg8[%c0_18, %c0_19] : memref<8x128xf32, #tpu.memory_space<vmem>>, vector<8x128xf32>
    tpu.vector_store %arg8[%c0_18, %c0_19], %24 {strides = array<i32>} : memref<8x128xf32, #tpu.memory_space<vmem>>, vector<8x128xf32>,
    return
  }
  func.func @transform_0(%arg0: i32) -> (i32, i32) {
    %c0_i32 = arith.constant 0 : i32
    %c0_i32_0 = arith.constant 0 : i32
    return %arg0, %c0_i32 : i32, i32
  }
  func.func @transform_1(%arg0: i32) -> (i32, i32) {
    %c0_i32 = arith.constant 0 : i32
    %c0_i32_0 = arith.constant 0 : i32
    %c0_i32_1 = arith.constant 0 : i32
    return %c0_i32, %c0_i32_0 : i32, i32
  }
  func.func @transform_2(%arg0: i32) -> (i32, i32) {
    %c0_i32 = arith.constant 0 : i32
    %c0_i32_0 = arith.constant 0 : i32
    %c0_i32_1 = arith.constant 0 : i32
    return %c0_i32, %c0_i32_0 : i32, i32
  }
  func.func @transform_3(%arg0: i32) -> (i32, i32) {
    %c0_i32 = arith.constant 0 : i32
    %c0_i32_0 = arith.constant 0 : i32
    %c0_i32_1 = arith.constant 0 : i32
    return %c0_i32, %c0_i32_0 : i32, i32
  }
  func.func @transform_4(%arg0: i32) -> (i32, i32) {
    %c0_i32 = arith.constant 0 : i32
    %c0_i32_0 = arith.constant 0 : i32
    %c0_i32_1 = arith.constant 0 : i32
    return %c0_i32, %c0_i32_0 : i32, i32
  }
  func.func @transform_5(%arg0: i32) -> (i32, i32) {
    %c0_i32 = arith.constant 0 : i32
    %c0_i32_0 = arith.constant 0 : i32
    %c0_i32_1 = arith.constant 0 : i32
    return %c0_i32, %c0_i32_0 : i32, i32
  }
  func.func @transform_6(%arg0: i32) -> (i32, i32) {
    %c0_i32 = arith.constant 0 : i32
    %c0_i32_0 = arith.constant 0 : i32
    %c0_i32_1 = arith.constant 0 : i32
    return %c0_i32, %c0_i32_0 : i32, i32
  }
  func.func @transform_7(%arg0: i32) -> (i32, i32) {
    %c0_i32 = arith.constant 0 : i32
    %c0_i32_0 = arith.constant 0 : i32
    return %arg0, %c0_i32 : i32, i32
  }
}

</mosaic_0001>

<llo_original>
// kernel: fc_encoder.1
$region0: #{fc_encoder.1}
  #allocation0 [shape = 'u32[]', space=smem, size = 0x4, offset = 0x4, fixed_abs, tag = 'smem constant byte address 0x4 - core index']
  #allocation1 [shape = 'u32[72,128]{1,0:T(1,128)}', space=vmem, size = 0x9000, scoped, tag = 'internal scratch']
  %s0 = inlined_call_operand.hbm [shape: f32[8,64], index: 0, kind: input, shape index: {}]
  %s1 = inlined_call_operand.hbm [shape: bf16[64,256], index: 1, kind: input, shape index: {}]
  %s2 = inlined_call_operand.hbm [shape: f32[1,256], index: 2, kind: input, shape index: {}]
  %s3 = inlined_call_operand.hbm [shape: bf16[256,128], index: 3, kind: input, shape index: {}]
  %s4 = inlined_call_operand.vmem [shape: f32[1,128], index: 4, kind: input, shape index: {}]
  %s5 = inlined_call_operand.hbm [shape: bf16[128,128], index: 5, kind: input, shape index: {}]
  %s6 = inlined_call_operand.vmem [shape: f32[1,128], index: 6, kind: input, shape index: {}]
  %s7 = inlined_call_operand.hbm [shape: f32[8,128], index: 7, kind: output, shape index: {}]
  %s8 = sld [smem:[#allocation0]]
  $region58: #{fc_encoder.1} parent=0
    _
  %s10 = ssub.s32 1, %s8
  %s11 = scalar_select 0, %s10, %s8
  $region1: #{fc_encoder.1} parent=0
    #allocation2 [shape = 'u8[4096]{0}', space=vmem, size = 0x1000, scoped, tag = 'input window, operand 0, single buffered']
    #allocation3 [shape = 's32[1]{0}', space=sflag, size = 0x4, scoped, tag = 'scoped memory for fc_encoder.1']
    #allocation4 [shape = 's32[1]{0}', space=sflag, size = 0x4, scoped, tag = 'scoped memory for fc_encoder.1']
    #allocation5 [shape = 'u8[32768]{0}', space=vmem, size = 0x8000, scoped, tag = 'input window, operand 1, single buffered']
    #allocation6 [shape = 's32[1]{0}', space=sflag, size = 0x4, scoped, tag = 'scoped memory for fc_encoder.1']
    #allocation7 [shape = 'u8[1024]{0}', space=vmem, size = 0x400, scoped, tag = 'input window, operand 2, single buffered']
    #allocation8 [shape = 'u8[65536]{0}', space=vmem, size = 0x10000, scoped, tag = 'input window, operand 3, single buffered']
    #allocation9 [shape = 's32[1]{0}', space=sflag, size = 0x4, scoped, tag = 'scoped memory for fc_encoder.1']
    #allocation10 [shape = 'u8[32768]{0}', space=vmem, size = 0x8000, scoped, tag = 'input window, operand 5, single buffered']
    #allocation11 [shape = 'u8[4096]{0}', space=vmem, size = 0x1000, scoped, tag = 'output window, operand 0, single buffered']
    %12 = vsyncpa [#allocation3], 0
    %13 = vsyncpa [#allocation6], 0
    %14 = vsyncpa [#allocation9], 0
    %15 = vsyncpa [#allocation4], 0
    // Predicated region
    $region2: #{fc_encoder.1} parent=1 // pred_check
      _
    $region3: #{fc_encoder.1} parent=1 // pred_check_branch
      %17 = sbr.rel (0) target = $region5
    $region4: #{fc_encoder.1} parent=1 // pred_region
      %19 = vsyncadd [#allocation3], 0
      %s21 = sshll.u32 %s0, 4
      %s22 = int_to_ptr.hbm [resolvable:$true] %s21
      %s23 = sshll.u32 [#allocation2], 4
      %s24 = int_to_ptr.vmem [resolvable:$true] %s23
      %26 = dma.hbm_to_vmem [thread:$0]  %s22, 128, %s24, [#allocation3]
    $region5: #{fc_encoder.1} parent=1 // pred_fallthru
      _
    // Predicated region
    $region6: #{fc_encoder.1} parent=1 // pred_check
      _
    $region7: #{fc_encoder.1} parent=1 // pred_check_branch
      %28 = sbr.rel (0) target = $region9
    $region8: #{fc_encoder.1} parent=1 // pred_region
      %30 = vsyncadd [#allocation6], 0
      %s31 = sshll.u32 %s1, 4
      %s32 = int_to_ptr.hbm [resolvable:$true] %s31
      %s33 = sshll.u32 [#allocation5], 4
      %s34 = int_to_ptr.vmem [resolvable:$true] %s33
      %39 = dma.hbm_to_vmem [thread:$0]  %s32, 1024, %s34, [#allocation6], 128, 128, 8
    $region9: #{fc_encoder.1} parent=1 // pred_fallthru
      _
    // Predicated region
    $region10: #{fc_encoder.1} parent=1 // pred_check
      _
    $region11: #{fc_encoder.1} parent=1 // pred_check_branch
      %41 = sbr.rel (0) target = $region13
    $region12: #{fc_encoder.1} parent=1 // pred_region
      %43 = vsyncadd [#allocation6], 0
      %s45 = sshll.u32 %s2, 4
      %s46 = int_to_ptr.hbm [resolvable:$true] %s45
      %s47 = sshll.u32 [#allocation7], 4
      %s48 = int_to_ptr.vmem [resolvable:$true] %s47
      %50 = dma.hbm_to_vmem [thread:$0]  %s46, 32, %s48, [#allocation6]
    $region13: #{fc_encoder.1} parent=1 // pred_fallthru
      _
    // Predicated region
    $region14: #{fc_encoder.1} parent=1 // pred_check
      _
    $region15: #{fc_encoder.1} parent=1 // pred_check_branch
      %52 = sbr.rel (0) target = $region17
    $region16: #{fc_encoder.1} parent=1 // pred_region
      %54 = vsyncadd [#allocation9], 0
      %s55 = sshll.u32 %s3, 4
      %s56 = int_to_ptr.hbm [resolvable:$true] %s55
      %s57 = sshll.u32 [#allocation8], 4
      %s58 = int_to_ptr.vmem [resolvable:$true] %s57
      %63 = dma.hbm_to_vmem [thread:$0]  %s56, 2048, %s58, [#allocation9], 64, 64, 4
    $region17: #{fc_encoder.1} parent=1 // pred_fallthru
      _
    // Predicated region
    $region18: #{fc_encoder.1} parent=1 // pred_check
      _
    $region19: #{fc_encoder.1} parent=1 // pred_check_branch
      %65 = sbr.rel (0) target = $region21
    $region20: #{fc_encoder.1} parent=1 // pred_region
      _
    $region21: #{fc_encoder.1} parent=1 // pred_fallthru
      _
    // Predicated region
    $region22: #{fc_encoder.1} parent=1 // pred_check
      _
    $region23: #{fc_encoder.1} parent=1 // pred_check_branch
      %67 = sbr.rel (0) target = $region25
    $region24: #{fc_encoder.1} parent=1 // pred_region
      %69 = vsyncadd [#allocation9], 0
      %s70 = sshll.u32 %s5, 4
      %s71 = int_to_ptr.hbm [resolvable:$true] %s70
      %s72 = sshll.u32 [#allocation10], 4
      %s73 = int_to_ptr.vmem [resolvable:$true] %s72
      %78 = dma.hbm_to_vmem [thread:$0]  %s71, 1024, %s73, [#allocation9], 64, 64, 4
    $region25: #{fc_encoder.1} parent=1 // pred_fallthru
      _
    // Predicated region
    $region26: #{fc_encoder.1} parent=1 // pred_check
      _
    $region27: #{fc_encoder.1} parent=1 // pred_check_branch
      %80 = sbr.rel (0) target = $region29
    $region28: #{fc_encoder.1} parent=1 // pred_region
      _
    $region29: #{fc_encoder.1} parent=1 // pred_fallthru
      _
    // Predicated region
    $region30: #{fc_encoder.1} parent=1 // pred_check
      _
    $region31: #{fc_encoder.1} parent=1 // pred_check_branch
      %82 = sbr.rel (0) target = $region33
    $region32: #{fc_encoder.1} parent=1 // pred_region
      %84 = dma.done [#allocation3], 128
    $region33: #{fc_encoder.1} parent=1 // pred_fallthru
      _
    // Predicated region
    $region34: #{fc_encoder.1} parent=1 // pred_check
      _
    $region35: #{fc_encoder.1} parent=1 // pred_check_branch
      %86 = sbr.rel (0) target = $region37
    $region36: #{fc_encoder.1} parent=1 // pred_region
      %88 = dma.done [#allocation6], 1024
    $region37: #{fc_encoder.1} parent=1 // pred_fallthru
      _
    // Predicated region
    $region38: #{fc_encoder.1} parent=1 // pred_check
      _
    $region39: #{fc_encoder.1} parent=1 // pred_check_branch
      %90 = sbr.rel (0) target = $region41
    $region40: #{fc_encoder.1} parent=1 // pred_region
      %92 = dma.done [#allocation6], 32
    $region41: #{fc_encoder.1} parent=1 // pred_fallthru
      _
    // Predicated region
    $region42: #{fc_encoder.1} parent=1 // pred_check
      _
    $region43: #{fc_encoder.1} parent=1 // pred_check_branch
      %94 = sbr.rel (0) target = $region45
    $region44: #{fc_encoder.1} parent=1 // pred_region
      %96 = dma.done [#allocation9], 2048
    $region45: #{fc_encoder.1} parent=1 // pred_fallthru
      _
    // Predicated region
    $region46: #{fc_encoder.1} parent=1 // pred_check
      _
    $region47: #{fc_encoder.1} parent=1 // pred_check_branch
      %98 = sbr.rel (0) target = $region49
    $region48: #{fc_encoder.1} parent=1 // pred_region
      %100 = dma.done [#allocation9], 1024
    $region49: #{fc_encoder.1} parent=1 // pred_fallthru
      _
    %v102 = vld [vmem:[#allocation2] sm:$0xff]
    %v103 = vpack.c.bf16 %v102, %v102
    %v104 = vld [vmem:[#allocation5] sm:$0xff]
    %v105 = vld [vmem:[#allocation5 + $0x8] sm:$0xff]
    %v106 = vld [vmem:[#allocation5 + $0x10] sm:$0xff]
    %v107 = vld [vmem:[#allocation5 + $0x18] sm:$0xff]
    %v108 = vld [vmem:[#allocation5 + $0x20] sm:$0xff]
    %v109 = vld [vmem:[#allocation5 + $0x28] sm:$0xff]
    %v110 = vld [vmem:[#allocation5 + $0x30] sm:$0xff]
    %v111 = vld [vmem:[#allocation5 + $0x38] sm:$0xff]
    %v112 = vld [vmem:[#allocation7] sm:$0x3]
    %v114 = vperm.slane %v112, 0
    %v115 = vperm.slane %v112, 1
    %v126 = vunpack.c.l.b16 %v104
    %v127 = vunpack.c.h.b16 %v104
    %v128 = vunpack.c.l.b16 %v105
    %v129 = vunpack.c.h.b16 %v105
    %v130 = vunpack.c.l.b16 %v106
    %v131 = vunpack.c.h.b16 %v106
    %v132 = vunpack.c.l.b16 %v107
    %v133 = vunpack.c.h.b16 %v107
    %v134 = vunpack.c.l.b16 %v108
    %v135 = vunpack.c.h.b16 %v108
    %v136 = vunpack.c.l.b16 %v109
    %v137 = vunpack.c.h.b16 %v109
    %v138 = vunpack.c.l.b16 %v110
    %v139 = vunpack.c.h.b16 %v110
    %v140 = vunpack.c.l.b16 %v111
    %v141 = vunpack.c.h.b16 %v111
    %v142 = vpack.c.b16 %v128, %v126
    %v143 = vpack.c.b16 %v129, %v127
    %v144 = vpack.c.b16 %v132, %v130
    %v145 = vpack.c.b16 %v133, %v131
    %v146 = vpack.c.b16 %v136, %v134
    %v147 = vpack.c.b16 %v137, %v135
    %v148 = vpack.c.b16 %v140, %v138
    %v149 = vpack.c.b16 %v141, %v139
    %vm158 = vcmask 523264
    %v160 = vsel %vm158, %v103, 0
    %162 = vmatpush.bf16.msra.mxu0 0
    %163 = vmatpush.bf16.msra.mxu0 0
    %164 = vmatpush.bf16.msra.mxu0 0
    %165 = vmatpush.bf16.msra.mxu0 0
    %166 = vmatpush.bf16.msra.mxu0 %v148
    %167 = vmatpush.bf16.msra.mxu0 %v146
    %168 = vmatpush.bf16.msra.mxu0 %v144
    %169 = vmatpush.bf16.msra.mxu0 %v142
    %170 = vmatmul.bf16.gmra.mxu0 %v160
    %v171 = vpop.f32.mrf.mxu0
    %v172 = vadd.f32 %v114, %v171
    %v173 = vpop.f32.mrf.mxu0
    %174 = vdwg.mxu0
    %175 = vmatpush.bf16.msra.mxu0 0
    %176 = vmatpush.bf16.msra.mxu0 0
    %177 = vmatpush.bf16.msra.mxu0 0
    %178 = vmatpush.bf16.msra.mxu0 0
    %179 = vmatpush.bf16.msra.mxu0 %v149
    %180 = vmatpush.bf16.msra.mxu0 %v147
    %181 = vmatpush.bf16.msra.mxu0 %v145
    %182 = vmatpush.bf16.msra.mxu0 %v143
    %183 = vmatmul.bf16.gmra.mxu0 %v160
    %v184 = vpop.f32.mrf.mxu0
    %v185 = vadd.f32 %v115, %v184
    %v186 = vpop.f32.mrf.mxu0
    %187 = vdwg.mxu0
    %v188 = vmax.f32 %v172, 0.0
    %v189 = vmax.f32 %v185, 0.0
    %v190 = vpack.c.bf16 %v188, %v188
    %v191 = vpack.c.bf16 %v189, %v189
    %v192 = vld [vmem:[#allocation8] sm:$0xf]
    %v193 = vld [vmem:[#allocation8 + $0x4] sm:$0xf]
    %v194 = vld [vmem:[#allocation8 + $0x8] sm:$0xf]
    %v195 = vld [vmem:[#allocation8 + $0xc] sm:$0xf]
    %v196 = vld [vmem:[#allocation8 + $0x10] sm:$0xf]
    %v197 = vld [vmem:[#allocation8 + $0x14] sm:$0xf]
    %v198 = vld [vmem:[#allocation8 + $0x18] sm:$0xf]
    %v199 = vld [vmem:[#allocation8 + $0x1c] sm:$0xf]
    %v200 = vld [vmem:[#allocation8 + $0x20] sm:$0xf]
    %v201 = vld [vmem:[#allocation8 + $0x24] sm:$0xf]
    %v202 = vld [vmem:[#allocation8 + $0x28] sm:$0xf]
    %v203 = vld [vmem:[#allocation8 + $0x2c] sm:$0xf]
    %v204 = vld [vmem:[#allocation8 + $0x30] sm:$0xf]
    %v205 = vld [vmem:[#allocation8 + $0x34] sm:$0xf]
    %v206 = vld [vmem:[#allocation8 + $0x38] sm:$0xf]
    %v207 = vld [vmem:[#allocation8 + $0x3c] sm:$0xf]
    %v208 = vld [vmem:[#allocation8 + $0x40] sm:$0xf]
    %v209 = vld [vmem:[#allocation8 + $0x44] sm:$0xf]
    %v210 = vld [vmem:[#allocation8 + $0x48] sm:$0xf]
    %v211 = vld [vmem:[#allocation8 + $0x4c] sm:$0xf]
    %v212 = vld [vmem:[#allocation8 + $0x50] sm:$0xf]
    %v213 = vld [vmem:[#allocation8 + $0x54] sm:$0xf]
    %v214 = vld [vmem:[#allocation8 + $0x58] sm:$0xf]
    %v215 = vld [vmem:[#allocation8 + $0x5c] sm:$0xf]
    %v216 = vld [vmem:[#allocation8 + $0x60] sm:$0xf]
    %v217 = vld [vmem:[#allocation8 + $0x64] sm:$0xf]
    %v218 = vld [vmem:[#allocation8 + $0x68] sm:$0xf]
    %v219 = vld [vmem:[#allocation8 + $0x6c] sm:$0xf]
    %v220 = vld [vmem:[#allocation8 + $0x70] sm:$0xf]
    %v221 = vld [vmem:[#allocation8 + $0x74] sm:$0xf]
    %v222 = vld [vmem:[#allocation8 + $0x78] sm:$0xf]
    %v223 = vld [vmem:[#allocation8 + $0x7c] sm:$0xf]
    %v224 = vld [vmem:[%s4] sm:$0x1]
    %v226 = vperm.slane %v224, 0
    %v260 = vunpack.c.l.b16 %v192
    %v261 = vunpack.c.l.b16 %v193
    %v262 = vunpack.c.l.b16 %v194
    %v263 = vunpack.c.l.b16 %v195
    %v264 = vunpack.c.l.b16 %v196
    %v265 = vunpack.c.l.b16 %v197
    %v266 = vunpack.c.l.b16 %v198
    %v267 = vunpack.c.l.b16 %v199
    %v268 = vunpack.c.l.b16 %v200
    %v269 = vunpack.c.l.b16 %v201
    %v270 = vunpack.c.l.b16 %v202
    %v271 = vunpack.c.l.b16 %v203
    %v272 = vunpack.c.l.b16 %v204
    %v273 = vunpack.c.l.b16 %v205
    %v274 = vunpack.c.l.b16 %v206
    %v275 = vunpack.c.l.b16 %v207
    %v276 = vunpack.c.l.b16 %v208
    %v277 = vunpack.c.l.b16 %v209
    %v278 = vunpack.c.l.b16 %v210
    %v279 = vunpack.c.l.b16 %v211
    %v280 = vunpack.c.l.b16 %v212
    %v281 = vunpack.c.l.b16 %v213
    %v282 = vunpack.c.l.b16 %v214
    %v283 = vunpack.c.l.b16 %v215
    %v284 = vunpack.c.l.b16 %v216
    %v285 = vunpack.c.l.b16 %v217
    %v286 = vunpack.c.l.b16 %v218
    %v287 = vunpack.c.l.b16 %v219
    %v288 = vunpack.c.l.b16 %v220
    %v289 = vunpack.c.l.b16 %v221
    %v290 = vunpack.c.l.b16 %v222
    %v291 = vunpack.c.l.b16 %v223
    %v292 = vpack.c.b16 %v261, %v260
    %v293 = vpack.c.b16 %v263, %v262
    %v294 = vpack.c.b16 %v265, %v264
    %v295 = vpack.c.b16 %v267, %v266
    %v296 = vpack.c.b16 %v269, %v268
    %v297 = vpack.c.b16 %v271, %v270
    %v298 = vpack.c.b16 %v273, %v272
    %v299 = vpack.c.b16 %v275, %v274
    %v300 = vpack.c.b16 %v277, %v276
    %v301 = vpack.c.b16 %v279, %v278
    %v302 = vpack.c.b16 %v281, %v280
    %v303 = vpack.c.b16 %v283, %v282
    %v304 = vpack.c.b16 %v285, %v284
    %v305 = vpack.c.b16 %v287, %v286
    %v306 = vpack.c.b16 %v289, %v288
    %v307 = vpack.c.b16 %v291, %v290
    %324 = vmatpush.bf16.msra.mxu0 %v299
    %325 = vmatpush.bf16.msra.mxu0 %v298
    %326 = vmatpush.bf16.msra.mxu0 %v297
    %327 = vmatpush.bf16.msra.mxu0 %v296
    %328 = vmatpush.bf16.msra.mxu0 %v295
    %329 = vmatpush.bf16.msra.mxu0 %v294
    %330 = vmatpush.bf16.msra.mxu0 %v293
    %331 = vmatpush.bf16.msra.mxu0 %v292
    %332 = vmatmul.bf16.gmra.mxu0 %v190
    %v333 = vpop.f32.mrf.mxu0
    %v334 = vadd.f32 %v226, %v333
    %v335 = vpop.f32.mrf.mxu0
    %336 = vdwg.mxu0
    %337 = vmatpush.bf16.msra.mxu0 %v307
    %338 = vmatpush.bf16.msra.mxu0 %v306
    %339 = vmatpush.bf16.msra.mxu0 %v305
    %340 = vmatpush.bf16.msra.mxu0 %v304
    %341 = vmatpush.bf16.msra.mxu0 %v303
    %342 = vmatpush.bf16.msra.mxu0 %v302
    %343 = vmatpush.bf16.msra.mxu0 %v301
    %344 = vmatpush.bf16.msra.mxu0 %v300
    %345 = vmatmul.bf16.gmra.mxu0 %v191
    %v346 = vpop.f32.mrf.mxu0
    %v347 = vadd.f32 %v334, %v346
    %v348 = vpop.f32.mrf.mxu0
    %349 = vdwg.mxu0
    %v350 = vmax.f32 %v347, 0.0
    %v351 = vpack.c.bf16 %v350, %v350
    %v352 = vld [vmem:[#allocation10] sm:$0xf]
    %v353 = vld [vmem:[#allocation10 + $0x4] sm:$0xf]
    %v354 = vld [vmem:[#allocation10 + $0x8] sm:$0xf]
    %v355 = vld [vmem:[#allocation10 + $0xc] sm:$0xf]
    %v356 = vld [vmem:[#allocation10 + $0x10] sm:$0xf]
    %v357 = vld [vmem:[#allocation10 + $0x14] sm:$0xf]
    %v358 = vld [vmem:[#allocation10 + $0x18] sm:$0xf]
    %v359 = vld [vmem:[#allocation10 + $0x1c] sm:$0xf]
    %v360 = vld [vmem:[#allocation10 + $0x20] sm:$0xf]
    %v361 = vld [vmem:[#allocation10 + $0x24] sm:$0xf]
    %v362 = vld [vmem:[#allocation10 + $0x28] sm:$0xf]
    %v363 = vld [vmem:[#allocation10 + $0x2c] sm:$0xf]
    %v364 = vld [vmem:[#allocation10 + $0x30] sm:$0xf]
    %v365 = vld [vmem:[#allocation10 + $0x34] sm:$0xf]
    %v366 = vld [vmem:[#allocation10 + $0x38] sm:$0xf]
    %v367 = vld [vmem:[#allocation10 + $0x3c] sm:$0xf]
    %v368 = vld [vmem:[%s6] sm:$0x1]
    %v370 = vperm.slane %v368, 0
    %v388 = vunpack.c.l.b16 %v352
    %v389 = vunpack.c.l.b16 %v353
    %v390 = vunpack.c.l.b16 %v354
    %v391 = vunpack.c.l.b16 %v355
    %v392 = vunpack.c.l.b16 %v356
    %v393 = vunpack.c.l.b16 %v357
    %v394 = vunpack.c.l.b16 %v358
    %v395 = vunpack.c.l.b16 %v359
    %v396 = vunpack.c.l.b16 %v360
    %v397 = vunpack.c.l.b16 %v361
    %v398 = vunpack.c.l.b16 %v362
    %v399 = vunpack.c.l.b16 %v363
    %v400 = vunpack.c.l.b16 %v364
    %v401 = vunpack.c.l.b16 %v365
    %v402 = vunpack.c.l.b16 %v366
    %v403 = vunpack.c.l.b16 %v367
    %v404 = vpack.c.b16 %v389, %v388
    %v405 = vpack.c.b16 %v391, %v390
    %v406 = vpack.c.b16 %v393, %v392
    %v407 = vpack.c.b16 %v395, %v394
    %v408 = vpack.c.b16 %v397, %v396
    %v409 = vpack.c.b16 %v399, %v398
    %v410 = vpack.c.b16 %v401, %v400
    %v411 = vpack.c.b16 %v403, %v402
    %420 = vmatpush.bf16.msra.mxu0 %v411
    %421 = vmatpush.bf16.msra.mxu0 %v410
    %422 = vmatpush.bf16.msra.mxu0 %v409
    %423 = vmatpush.bf16.msra.mxu0 %v408
    %424 = vmatpush.bf16.msra.mxu0 %v407
    %425 = vmatpush.bf16.msra.mxu0 %v406
    %426 = vmatpush.bf16.msra.mxu0 %v405
    %427 = vmatpush.bf16.msra.mxu0 %v404
    %428 = vmatmul.bf16.gmra.mxu0 %v351
    %v429 = vpop.f32.mrf.mxu0
    %v430 = vadd.f32 %v370, %v429
    %v431 = vpop.f32.mrf.mxu0
    %432 = vdwg.mxu0
    %v433 = vmax.f32 %v430, 0.0
    %434 = vst [vmem:[#allocation11] sm:$0xff] %v433
    // Predicated region
    $region50: #{fc_encoder.1} parent=1 // pred_check
      _
    $region51: #{fc_encoder.1} parent=1 // pred_check_branch
      %436 = sbr.rel (0) target = $region53
    $region52: #{fc_encoder.1} parent=1 // pred_region
      %438 = vsyncadd [#allocation4], 0
      %s440 = sshll.u32 [#allocation11], 4
      %s441 = int_to_ptr.vmem [resolvable:$true] %s440
      %s442 = sshll.u32 %s7, 4
      %s443 = int_to_ptr.hbm [resolvable:$true] %s442
      %445 = dma.vmem_to_hbm [thread:$0]  %s441, 128, %s443, [#allocation4]
    $region53: #{fc_encoder.1} parent=1 // pred_fallthru
      _
    // Predicated region
    $region54: #{fc_encoder.1} parent=1 // pred_check
      _
    $region55: #{fc_encoder.1} parent=1 // pred_check_branch
      %447 = sbr.rel (0) target = $region57
    $region56: #{fc_encoder.1} parent=1 // pred_region
      %449 = dma.done [#allocation4], 128
    $region57: #{fc_encoder.1} parent=1 // pred_fallthru
      _
    %450 = vsyncpa [#allocation3], 1
    %451 = vsyncpa [#allocation6], 1
    %452 = vsyncpa [#allocation9], 1
    %453 = vsyncpa [#allocation4], 1

</llo_original>
